<compile_context>
chip_gen: v7x
topology: tpu7x:2x2x1
jax: 0.10.0
libtpu: 0.0.40
codegen_flags: <defaults>
</compile_context>

<pallas_src>
import functools

import jax
import jax.numpy as jnp
from jax.experimental import pallas as pl
from jax.experimental.pallas import tpu as pltpu


def _round_up(x, m):
    return (x + m - 1) // m * m


def _pad_axis(x, axis, target):
    pad = target - x.shape[axis]
    if pad == 0:
        return x
    widths = [(0, 0)] * x.ndim
    widths[axis] = (0, pad)
    return jnp.pad(x, widths)


# ---------------------------------------------------------------------------
# One-time weight preparation (hoist pad + bf16 cast out of the hot path).
# ---------------------------------------------------------------------------
def prepare_clip_weights(w_img, w_txt, *, tf=None):
    """Pad and cast the projection weights once.

    Returns a dict with the padded bf16 weights plus the static geometry
    (tf, F, D) consumed by clip_predict_head.  For real CLIP sizes call this
    once at load time, not per inference."""
    F, D = w_img.shape
    Dt = w_txt.shape[0]
    D_pad = _round_up(D, 128)
    Dt_pad = _round_up(Dt, 128)

    if tf is None:
        # ~4 MiB bf16 w_img block per pipeline buffer: big enough that each
        # grid step's DMA dwarfs the ~0.35 us per-step overhead, small enough
        # that the double-buffered stream fits every generation's VMEM.
        tf = (4 << 20) // (D_pad * 2)
        tf = max(256, min(2048, (tf // 256) * 256))
    tf = min(tf, _round_up(F, 256))           # multiple of 256 (lane-aligned)
    F_pad = _round_up(F, tf)

    wimg_p = _pad_axis(_pad_axis(w_img, 0, F_pad), 1, D_pad).astype(jnp.bfloat16)
    wtxt_p = _pad_axis(_pad_axis(w_txt, 0, Dt_pad), 1, D_pad).astype(jnp.bfloat16)
    return dict(wimg_p=wimg_p, wtxt_p=wtxt_p, tf=tf, F=F, D=D,
                F_pad=F_pad, D_pad=D_pad, Dt=Dt, Dt_pad=Dt_pad)


# ---------------------------------------------------------------------------
# Text branch: (T, Dt) @ (Dt, D) -> L2-normalize -> * logit_scale -> transpose.
# Runs once; tiny, so a single whole-block call is fine.  Output is emitted
# pre-transposed as (D_pad, T_pad) so the image epilogue needs no transpose.
# ---------------------------------------------------------------------------
def text_head_kernel(scale_ref, txt_ref, wtxt_ref, out_ref):
    txt_f = jnp.dot(txt_ref[...], wtxt_ref[...],
                    preferred_element_type=jnp.float32)          # (T_pad, D_pad)
    inv_norm = jax.lax.rsqrt(
        jnp.sum(txt_f * txt_f, axis=-1, keepdims=True) + 1e-12)
    # Fold logit_scale into the text features: the image kernel's similarity
    # matmul then directly produces logits_per_image.
    scaled = scale_ref[0, 0] * txt_f * inv_norm
    out_ref[...] = scaled.T.astype(out_ref.dtype)                # (D_pad, T_pad)


# ---------------------------------------------------------------------------
# Image branch + similarity + softmax, tiled over (B tiles, F reduction).
# n_text is static (trace-time) so the padded-column mask is a free iota cmp.
# ---------------------------------------------------------------------------
def image_head_kernel(x_ref, wimg_ref, txtn_ref, probs_ref, logits_ref,
                      acc_ref, *, n_text):
    k = pl.program_id(1)

    @pl.when(k == 0)
    def _init():
        acc_ref[...] = jnp.zeros_like(acc_ref)

    # (tb, tf) @ (tf, D_pad) partial product: bf16 operands, f32 accumulation.
    acc_ref[...] += jnp.dot(x_ref[...], wimg_ref[...],
                            preferred_element_type=jnp.float32)

    @pl.when(k == pl.num_programs(1) - 1)
    def _finalize():
        img_f = acc_ref[...]
        img_n = img_f * jax.lax.rsqrt(
            jnp.sum(img_f * img_f, axis=-1, keepdims=True) + 1e-12)
        # logits_per_image tile: standard (1,0) contraction against the
        # pre-transposed, pre-scaled text features (D_pad, T_pad).
        logits = jax.lax.dot_general(
            img_n.astype(jnp.bfloat16), txtn_ref[...],
            dimension_numbers=(((1,), (0,)), ((), ())),
            preferred_element_type=jnp.float32)                  # (tb, T_pad)
        logits_ref[...] = logits

        # Mask padded text columns in-kernel (static compare, no extra input),
        # then numerically stable softmax.
        col = jax.lax.broadcasted_iota(jnp.int32, logits.shape, 1)
        masked = jnp.where(col < n_text, logits, -1e30)
        m = jnp.max(masked, axis=-1, keepdims=True)
        e = jnp.exp(masked - m)
        denom = jnp.sum(e, axis=-1, keepdims=True)
        probs_ref[...] = e * pl.reciprocal(denom, approx=True)


def clip_predict_head(x_flat, txt_pooled, logit_scale, prep, *, tb=None):
    """x_flat: (B, F) f32; txt_pooled: (T, Dt) f32; logit_scale: (1, 1) f32;
    prep: output of prepare_clip_weights.  Returns
    (probs (B, T), logits_per_image (B, T))."""
    B, F = x_flat.shape
    T, Dt = txt_pooled.shape
    assert F == prep["F"] and Dt == prep["Dt"]
    tf, F_pad, D_pad, Dt_pad = prep["tf"], prep["F_pad"], prep["D_pad"], prep["Dt_pad"]
    T_pad = _round_up(T, 128)

    # --- batch tile: the arithmetic-intensity knob (each w_img byte reused
    # tb times).  Default 128; halve while that would leave the v7x-parallel
    # axis with a single tile (floor 16 = bf16 sublane).
    if tb is None:
        tb = 128
        while tb > 16 and _round_up(B, tb) // tb < 2:
            tb //= 2
        tb = max(tb, 16)
    B_pad = _round_up(B, tb)

    x_p = _pad_axis(_pad_axis(x_flat, 0, B_pad), 1, F_pad).astype(jnp.bfloat16)
    txt_p = _pad_axis(_pad_axis(txt_pooled, 0, T_pad), 1, Dt_pad).astype(jnp.bfloat16)

    vmem = pl.BlockSpec(memory_space=pltpu.MemorySpace.VMEM)
    smem = pl.BlockSpec(memory_space=pltpu.MemorySpace.SMEM)

    # ---- text branch: one tiny call, hoisted out of the image grid ---------
    txt_sn = pl.pallas_call(
        text_head_kernel,
        out_shape=jax.ShapeDtypeStruct((D_pad, T_pad), jnp.bfloat16),
        in_specs=[smem, vmem, vmem],
        out_specs=vmem,
    )(logit_scale, txt_p, prep["wtxt_p"])

    # ---- VMEM budget: double-buffered working set, capped for v7x (64 MiB) --
    working = (
        2 * tb * tf * 2            # x tiles (bf16, double-buffered)
        + 2 * tf * D_pad * 2       # w_img tiles (bf16, double-buffered)
        + 2 * D_pad * T_pad * 2    # scaled/transposed text features
        + 2 * 2 * tb * T_pad * 4   # probs + logits output tiles (f32)
        + tb * D_pad * 4           # f32 accumulator scratch
    )
    vmem_limit = int(min(max(2 * working + (2 << 20), 16 << 20), 48 << 20))

    # ---- image branch + similarity + softmax, gridded -----------------------
    grid = (B_pad // tb, F_pad // tf)
    kernel = functools.partial(image_head_kernel, n_text=T)
    probs_p, logits_p = pl.pallas_call(
        kernel,
        out_shape=(jax.ShapeDtypeStruct((B_pad, T_pad), jnp.float32),
                   jax.ShapeDtypeStruct((B_pad, T_pad), jnp.float32)),
        grid_spec=pltpu.PrefetchScalarGridSpec(
            num_scalar_prefetch=0,
            grid=grid,
            in_specs=[
                pl.BlockSpec((tb, tf), lambda i, k: (i, k)),        # x tile
                pl.BlockSpec((tf, D_pad), lambda i, k: (k, 0)),     # w_img tile
                pl.BlockSpec((D_pad, T_pad), lambda i, k: (0, 0)),  # scaled txt_n^T
            ],
            out_specs=[
                pl.BlockSpec((tb, T_pad), lambda i, k: (i, 0)),     # probs
                pl.BlockSpec((tb, T_pad), lambda i, k: (i, 0)),     # logits
            ],
            scratch_shapes=[pltpu.VMEM((tb, D_pad), jnp.float32)],
        ),
        compiler_params=pltpu.CompilerParams(
            dimension_semantics=("parallel", "arbitrary"),
            vmem_limit_bytes=vmem_limit),
    )(x_p, prep["wimg_p"], txt_sn)

    return probs_p[:B, :T], logits_p[:B, :T]


if __name__ == "__main__":
    # ---- small deterministic setup (synthetic CLIP) ------------------------
    B, C, H, W = 2, 3, 16, 16          # image batch, NCHW
    T, L = 8, 8                        # number of text prompts, token length
    V = 64                             # vocab size
    Dt = 32                            # text embedding dim
    D = 32                             # joint embedding dim
    F = C * H * W                      # flattened image features

    key = jax.random.PRNGKey(0)
    k_img, k_wimg, k_tok, k_emb, k_wtxt = jax.random.split(key, 5)

    # "preprocessed" image batch (would be Resize/CenterCrop/Normalize output)
    image = jax.random.normal(k_img, (B, C, H, W), dtype=jnp.float32)
    # "tokenized" text prompts
    tokens = jax.random.randint(k_tok, (T, L), 0, V, dtype=jnp.int32)

    # deterministic synthetic parameters (stand-in for CLIP weights)
    w_img = jax.random.normal(k_wimg, (F, D), dtype=jnp.float32) * 0.02
    emb_table = jax.random.normal(k_emb, (V, Dt), dtype=jnp.float32) * 0.02
    w_txt = jax.random.normal(k_wtxt, (Dt, D), dtype=jnp.float32) * 0.02
    logit_scale = jnp.full((1, 1), 100.0, dtype=jnp.float32)  # exp(log_scale)~100

    # ---- JAX glue: flatten NCHW image; embed + mean-pool text --------------
    x_flat = image.reshape(B, F)
    txt_pooled = jnp.mean(emb_table[tokens], axis=1)   # (T, Dt)

    # TODO(synk): PIL image loading / cv2 drawing / BPE tokenization have no
    # Pallas equivalent; replaced by deterministic synthetic inputs above.

    # one-time weight prep (pad + bf16 cast), hoisted out of the hot path
    prep = prepare_clip_weights(w_img, w_txt)

    probs, logits_per_image = clip_predict_head(
        x_flat, txt_pooled, logit_scale, prep)
    logits_per_text = logits_per_image.T
    idx = jnp.argmax(probs, axis=1)
    jax.block_until_ready((probs, logits_per_image, logits_per_text, idx))

    # ---- sanity checks -------------------------------------------------------
    # softmax rows sum to 1 (approx reciprocal => slightly looser tolerance)
    assert jnp.allclose(jnp.sum(probs, axis=-1), 1.0, atol=2e-3)

    # pure-JAX reference with matching bf16 operand rounding
    def _bf(a):
        return a.astype(jnp.bfloat16).astype(jnp.float32)

    img_f = _bf(x_flat) @ _bf(w_img)
    img_n = img_f * jax.lax.rsqrt(
        jnp.sum(img_f * img_f, axis=-1, keepdims=True) + 1e-12)
    txt_f = _bf(txt_pooled) @ _bf(w_txt)
    txt_n = txt_f * jax.lax.rsqrt(
        jnp.sum(txt_f * txt_f, axis=-1, keepdims=True) + 1e-12)
    ref_logits = _bf(img_n) @ _bf(logit_scale[0, 0] * txt_n).T
    ref_probs = jax.nn.softmax(ref_logits, axis=-1)

    assert jnp.allclose(logits_per_image, ref_logits, atol=0.2)
    assert jnp.allclose(probs, ref_probs, atol=0.05)
    print("KERNEL_OK")
</pallas_src>

<mosaic_0001>
module attributes {stable_mosaic.version = 11 : i64} {
  func.func @text_head_kernel(%arg0: memref<1x1xf32, #tpu.memory_space<smem>>, %arg1: memref<128x128xbf16, #tpu.memory_space<vmem>>, %arg2: memref<128x128xbf16, #tpu.memory_space<vmem>>, %arg3: memref<128x128xbf16, #tpu.memory_space<vmem>>) attributes {dimension_semantics = [], scalar_prefetch = 0 : i64, scratch_operands = 0 : i64, tpu.core_type = #tpu.core_type<tc>} {
    %c0 = arith.constant 0 : index
    %c0_0 = arith.constant 0 : index
    %0 = vector.load %arg1[%c0, %c0_0] : memref<128x128xbf16, #tpu.memory_space<vmem>>, vector<128x128xbf16>
    %c0_1 = arith.constant 0 : index
    %c0_2 = arith.constant 0 : index
    %1 = vector.load %arg2[%c0_1, %c0_2] : memref<128x128xbf16, #tpu.memory_space<vmem>>, vector<128x128xbf16>
    %cst = arith.constant dense<0.000000e+00> : vector<128x128xf32>
    %2 = tpu.matmul %0, %1, %cst {dimension_numbers = #tpu.dot_dimension_numbers<[1], [0], [0], [1], [0, 0, 1, 1], [], []>} : vector<128x128xbf16>, vector<128x128xbf16>, vector<128x128xf32> -> vector<128x128xf32>
    %3 = arith.mulf %2, %2 : vector<128x128xf32>
    %cst_3 = arith.constant dense<0.000000e+00> : vector<128xf32>
    %4 = vector.multi_reduction <add>, %3, %cst_3 [1] : vector<128x128xf32> to vector<128xf32>
    %5 = vector.shape_cast %4 : vector<128xf32> to vector<128x1xf32>
    %cst_4 = arith.constant 9.99999996E-13 : f32
    %6 = vector.broadcast %cst_4 : f32 to vector<128x1xf32>
    %7 = arith.addf %5, %6 : vector<128x1xf32>
    %8 = math.rsqrt %7 : vector<128x1xf32>
    %c0_5 = arith.constant 0 : index
    %c0_6 = arith.constant 0 : index
    %9 = memref.load %arg0[%c0_5, %c0_6] : memref<1x1xf32, #tpu.memory_space<smem>>
    %10 = vector.broadcast %9 : f32 to vector<128x128xf32>
    %11 = arith.mulf %10, %2 : vector<128x128xf32>
    %12 = vector.broadcast %8 : vector<128x1xf32> to vector<128x128xf32>
    %13 = arith.mulf %11, %12 : vector<128x128xf32>
    %14 = tpu.transpose %13, [1, 0] : vector<128x128xf32> -> vector<128x128xf32>
    %15 = arith.truncf %14 : vector<128x128xf32> to vector<128x128xbf16>
    %c0_7 = arith.constant 0 : index
    %c0_8 = arith.constant 0 : index
    %16 = vector.load %arg3[%c0_7, %c0_8] : memref<128x128xbf16, #tpu.memory_space<vmem>>, vector<128x128xbf16>
    tpu.vector_store %arg3[%c0_7, %c0_8], %15 {strides = array<i32>} : memref<128x128xbf16, #tpu.memory_space<vmem>>, vector<128x128xbf16>,
    return
  }
}

</mosaic_0001>

<llo_original>
// kernel: tpu_custom_call.1
$region0: #{tpu_custom_call.1}
  #allocation0 [shape = 'u32[]', space=smem, size = 0x4, offset = 0x4, fixed_abs, tag = 'smem constant byte address 0x4 - core index']
  #allocation1 [shape = 'u32[144,128]{1,0:T(1,128)}', space=vmem, size = 0x12000, scoped, tag = 'internal scratch']
  #allocation2 [shape = 'f32[1,1]{1,0:T(1,128)S(6)}', space=smem, size = 0x200, scoped, tag = 'scoped memory for tpu_custom_call.1']
  %s0 = inlined_call_operand.<no memory space> [shape: f32[1,1], index: 0, kind: input, shape index: {}]
  %s1 = inlined_call_operand.hbm [shape: bf16[128,128], index: 1, kind: input, shape index: {}]
  %s2 = inlined_call_operand.hbm [shape: bf16[128,128], index: 2, kind: input, shape index: {}]
  %s3 = inlined_call_operand.hbm [shape: bf16[128,128], index: 3, kind: output, shape index: {}]
  %s4 = sld [smem:[#allocation0]]
  $region30: #{tpu_custom_call.1} parent=0
    _
  %s6 = ssub.s32 1, %s4
  %s7 = scalar_select 0, %s6, %s4
  %8 = sst [smem:[#allocation2]] %s0
  $region1: #{tpu_custom_call.1} parent=0
    #allocation3 [shape = 'u8[32768]{0}', space=vmem, size = 0x8000, scoped, tag = 'input window, operand 1, single buffered']
    #allocation4 [shape = 's32[1]{0}', space=sflag, size = 0x4, scoped, tag = 'scoped memory for tpu_custom_call.1']
    #allocation5 [shape = 's32[1]{0}', space=sflag, size = 0x4, scoped, tag = 'scoped memory for tpu_custom_call.1']
    #allocation6 [shape = 'u8[32768]{0}', space=vmem, size = 0x8000, scoped, tag = 'input window, operand 2, single buffered']
    #allocation7 [shape = 's32[1]{0}', space=sflag, size = 0x4, scoped, tag = 'scoped memory for tpu_custom_call.1']
    #allocation8 [shape = 'u8[32768]{0}', space=vmem, size = 0x8000, scoped, tag = 'output window, operand 0, single buffered']
    %9 = vsyncpa [#allocation4], 0
    %10 = vsyncpa [#allocation7], 0
    %11 = vsyncpa [#allocation5], 0
    // Predicated region
    $region2: #{tpu_custom_call.1} parent=1 // pred_check
      _
    $region3: #{tpu_custom_call.1} parent=1 // pred_check_branch
      %13 = sbr.rel (0) target = $region5
    $region4: #{tpu_custom_call.1} parent=1 // pred_region
      _
    $region5: #{tpu_custom_call.1} parent=1 // pred_fallthru
      _
    // Predicated region
    $region6: #{tpu_custom_call.1} parent=1 // pred_check
      _
    $region7: #{tpu_custom_call.1} parent=1 // pred_check_branch
      %15 = sbr.rel (0) target = $region9
    $region8: #{tpu_custom_call.1} parent=1 // pred_region
      %s17 = ssub.s32 1024, 1024
      %18 = vsyncadd [#allocation4], %s17
      %s19 = sshll.u32 [#allocation3], 4
      %s20 = int_to_ptr.vmem [resolvable:$true] %s19
      %25 = dma.hbm_to_vmem [thread:$0]  %s1, 1024, %s20, [#allocation4], 64, 64, 4
    $region9: #{tpu_custom_call.1} parent=1 // pred_fallthru
      _
    // Predicated region
    $region10: #{tpu_custom_call.1} parent=1 // pred_check
      _
    $region11: #{tpu_custom_call.1} parent=1 // pred_check_branch
      %27 = sbr.rel (0) target = $region13
    $region12: #{tpu_custom_call.1} parent=1 // pred_region
      %s29 = ssub.s32 1024, 1024
      %30 = vsyncadd [#allocation7], %s29
      %s31 = sshll.u32 [#allocation6], 4
      %s32 = int_to_ptr.vmem [resolvable:$true] %s31
      %37 = dma.hbm_to_vmem [thread:$0]  %s2, 1024, %s32, [#allocation7], 64, 64, 4
    $region13: #{tpu_custom_call.1} parent=1 // pred_fallthru
      _
    // Predicated region
    $region14: #{tpu_custom_call.1} parent=1 // pred_check
      _
    $region15: #{tpu_custom_call.1} parent=1 // pred_check_branch
      %39 = sbr.rel (0) target = $region17
    $region16: #{tpu_custom_call.1} parent=1 // pred_region
      %40 = dma.done [#allocation4], 1024
    $region17: #{tpu_custom_call.1} parent=1 // pred_fallthru
      _
    // Predicated region
    $region18: #{tpu_custom_call.1} parent=1 // pred_check
      _
    $region19: #{tpu_custom_call.1} parent=1 // pred_check_branch
      %42 = sbr.rel (0) target = $region21
    $region20: #{tpu_custom_call.1} parent=1 // pred_region
      %43 = dma.done [#allocation7], 1024
    $region21: #{tpu_custom_call.1} parent=1 // pred_fallthru
      _
    %v45 = vld [vmem:[#allocation3] sm:$0xf]
    %v46 = vld [vmem:[#allocation3 + $0x4] sm:$0xf]
    %v47 = vld [vmem:[#allocation3 + $0x8] sm:$0xf]
    %v48 = vld [vmem:[#allocation3 + $0xc] sm:$0xf]
    %v49 = vld [vmem:[#allocation3 + $0x10] sm:$0xf]
    %v50 = vld [vmem:[#allocation3 + $0x14] sm:$0xf]
    %v51 = vld [vmem:[#allocation3 + $0x18] sm:$0xf]
    %v52 = vld [vmem:[#allocation3 + $0x1c] sm:$0xf]
    %v53 = vld [vmem:[#allocation3 + $0x20] sm:$0xf]
    %v54 = vld [vmem:[#allocation3 + $0x24] sm:$0xf]
    %v55 = vld [vmem:[#allocation3 + $0x28] sm:$0xf]
    %v56 = vld [vmem:[#allocation3 + $0x2c] sm:$0xf]
    %v57 = vld [vmem:[#allocation3 + $0x30] sm:$0xf]
    %v58 = vld [vmem:[#allocation3 + $0x34] sm:$0xf]
    %v59 = vld [vmem:[#allocation3 + $0x38] sm:$0xf]
    %v60 = vld [vmem:[#allocation3 + $0x3c] sm:$0xf]
    %v61 = vld [vmem:[#allocation6] sm:$0xf]
    %v62 = vld [vmem:[#allocation6 + $0x4] sm:$0xf]
    %v63 = vld [vmem:[#allocation6 + $0x8] sm:$0xf]
    %v64 = vld [vmem:[#allocation6 + $0xc] sm:$0xf]
    %v65 = vld [vmem:[#allocation6 + $0x10] sm:$0xf]
    %v66 = vld [vmem:[#allocation6 + $0x14] sm:$0xf]
    %v67 = vld [vmem:[#allocation6 + $0x18] sm:$0xf]
    %v68 = vld [vmem:[#allocation6 + $0x1c] sm:$0xf]
    %v69 = vld [vmem:[#allocation6 + $0x20] sm:$0xf]
    %v70 = vld [vmem:[#allocation6 + $0x24] sm:$0xf]
    %v71 = vld [vmem:[#allocation6 + $0x28] sm:$0xf]
    %v72 = vld [vmem:[#allocation6 + $0x2c] sm:$0xf]
    %v73 = vld [vmem:[#allocation6 + $0x30] sm:$0xf]
    %v74 = vld [vmem:[#allocation6 + $0x34] sm:$0xf]
    %v75 = vld [vmem:[#allocation6 + $0x38] sm:$0xf]
    %v76 = vld [vmem:[#allocation6 + $0x3c] sm:$0xf]
    %v93 = vunpack.c.l.b16 %v45
    %v94 = vunpack.c.l.b16 %v46
    %v95 = vunpack.c.l.b16 %v47
    %v96 = vunpack.c.l.b16 %v48
    %v97 = vunpack.c.l.b16 %v49
    %v98 = vunpack.c.l.b16 %v50
    %v99 = vunpack.c.l.b16 %v51
    %v100 = vunpack.c.l.b16 %v52
    %v101 = vunpack.c.l.b16 %v53
    %v102 = vunpack.c.l.b16 %v54
    %v103 = vunpack.c.l.b16 %v55
    %v104 = vunpack.c.l.b16 %v56
    %v105 = vunpack.c.l.b16 %v57
    %v106 = vunpack.c.l.b16 %v58
    %v107 = vunpack.c.l.b16 %v59
    %v108 = vunpack.c.l.b16 %v60
    %v109 = vpack.c.b16 %v94, %v93
    %v110 = vpack.c.b16 %v96, %v95
    %v111 = vpack.c.b16 %v98, %v97
    %v112 = vpack.c.b16 %v100, %v99
    %v113 = vpack.c.b16 %v102, %v101
    %v114 = vpack.c.b16 %v104, %v103
    %v115 = vpack.c.b16 %v106, %v105
    %v116 = vpack.c.b16 %v108, %v107
    %v141 = vunpack.c.l.b16 %v61
    %v142 = vunpack.c.l.b16 %v62
    %v143 = vunpack.c.l.b16 %v63
    %v144 = vunpack.c.l.b16 %v64
    %v145 = vunpack.c.l.b16 %v65
    %v146 = vunpack.c.l.b16 %v66
    %v147 = vunpack.c.l.b16 %v67
    %v148 = vunpack.c.l.b16 %v68
    %v149 = vunpack.c.l.b16 %v69
    %v150 = vunpack.c.l.b16 %v70
    %v151 = vunpack.c.l.b16 %v71
    %v152 = vunpack.c.l.b16 %v72
    %v153 = vunpack.c.l.b16 %v73
    %v154 = vunpack.c.l.b16 %v74
    %v155 = vunpack.c.l.b16 %v75
    %v156 = vunpack.c.l.b16 %v76
    %v157 = vpack.c.b16 %v142, %v141
    %v158 = vpack.c.b16 %v144, %v143
    %v159 = vpack.c.b16 %v146, %v145
    %v160 = vpack.c.b16 %v148, %v147
    %v161 = vpack.c.b16 %v150, %v149
    %v162 = vpack.c.b16 %v152, %v151
    %v163 = vpack.c.b16 %v154, %v153
    %v164 = vpack.c.b16 %v156, %v155
    %173 = vmatprep.subr.bf16.mxu0 0
    %174 = vmatpush1.bf16.msra.mxu0 %v157
    %175 = vmatprep.subr.bf16.mxu0 0
    %176 = vmatpush1.bf16.msra.mxu0 %v158
    %177 = vmatprep.subr.bf16.mxu0 0
    %178 = vmatpush1.bf16.msra.mxu0 %v159
    %179 = vmatprep.subr.bf16.mxu0 0
    %180 = vmatpush1.bf16.msra.mxu0 %v160
    %181 = vmatprep.subr.bf16.mxu0 0
    %182 = vmatpush1.bf16.msra.mxu0 %v161
    %183 = vmatprep.subr.bf16.mxu0 0
    %184 = vmatpush1.bf16.msra.mxu0 %v162
    %185 = vmatprep.subr.bf16.mxu0 0
    %186 = vmatpush1.bf16.msra.mxu0 %v163
    %187 = vmatprep.subr.bf16.mxu0 0
    %188 = vmatpush1.bf16.msra.mxu0 %v164
    %189 = vmatprep.subr.bf16.mxu0 0
    %190 = vmatpush1.bf16.msra.mxu0 0
    %191 = vmatprep.subr.bf16.mxu0 0
    %192 = vmatpush1.bf16.msra.mxu0 0
    %193 = vmatprep.subr.bf16.mxu0 0
    %194 = vmatpush1.bf16.msra.mxu0 0
    %195 = vmatprep.subr.bf16.mxu0 0
    %196 = vmatpush1.bf16.msra.mxu0 0
    %197 = vmatprep.subr.bf16.mxu0 0
    %198 = vmatpush1.bf16.msra.mxu0 0
    %199 = vmatprep.subr.bf16.mxu0 0
    %200 = vmatpush1.bf16.msra.mxu0 0
    %201 = vmatprep.subr.bf16.mxu0 0
    %202 = vmatpush1.bf16.msra.mxu0 0
    %203 = vmatprep.subr.bf16.mxu0 0
    %204 = vmatpush1.bf16.msra.mxu0 0
    %205 = vmatprep.mubr.bf16.mxu0 0
    %206 = vmatmul.mubr.bf16.gmra.mrb[0].mxu0 %v109
    %v207 = vpop.f32.mrb[0].mxu0
    %v208 = vadd.f32 0.0, %v207
    %v209 = vpop.f32.mrb[0].mxu0
    %v210 = vpop.f32.mrb[0].mxu0
    %v211 = vadd.f32 0.0, %v210
    %v212 = vpop.f32.mrb[0].mxu0
    %213 = vmatprep.mubr.bf16.mxu0 0
    %214 = vmatmul.mubr.bf16.gmra.mrb[0].mxu0 %v110
    %v215 = vpop.f32.mrb[0].mxu0
    %v216 = vadd.f32 0.0, %v215
    %v217 = vpop.f32.mrb[0].mxu0
    %v218 = vpop.f32.mrb[0].mxu0
    %v219 = vadd.f32 0.0, %v218
    %v220 = vpop.f32.mrb[0].mxu0
    %221 = vmatprep.mubr.bf16.mxu0 0
    %222 = vmatmul.mubr.bf16.gmra.mrb[0].mxu0 %v111
    %v223 = vpop.f32.mrb[0].mxu0
    %v224 = vadd.f32 0.0, %v223
    %v225 = vpop.f32.mrb[0].mxu0
    %v226 = vpop.f32.mrb[0].mxu0
    %v227 = vadd.f32 0.0, %v226
    %v228 = vpop.f32.mrb[0].mxu0
    %229 = vmatprep.mubr.bf16.mxu0 0
    %230 = vmatmul.mubr.bf16.gmra.mrb[0].mxu0 %v112
    %v231 = vpop.f32.mrb[0].mxu0
    %v232 = vadd.f32 0.0, %v231
    %v233 = vpop.f32.mrb[0].mxu0
    %v234 = vpop.f32.mrb[0].mxu0
    %v235 = vadd.f32 0.0, %v234
    %v236 = vpop.f32.mrb[0].mxu0
    %237 = vmatprep.mubr.bf16.mxu0 0
    %238 = vmatmul.mubr.bf16.gmra.mrb[0].mxu0 %v113
    %v239 = vpop.f32.mrb[0].mxu0
    %v240 = vadd.f32 0.0, %v239
    %v241 = vpop.f32.mrb[0].mxu0
    %v242 = vpop.f32.mrb[0].mxu0
    %v243 = vadd.f32 0.0, %v242
    %v244 = vpop.f32.mrb[0].mxu0
    %245 = vmatprep.mubr.bf16.mxu0 0
    %246 = vmatmul.mubr.bf16.gmra.mrb[0].mxu0 %v114
    %v247 = vpop.f32.mrb[0].mxu0
    %v248 = vadd.f32 0.0, %v247
    %v249 = vpop.f32.mrb[0].mxu0
    %v250 = vpop.f32.mrb[0].mxu0
    %v251 = vadd.f32 0.0, %v250
    %v252 = vpop.f32.mrb[0].mxu0
    %253 = vmatprep.mubr.bf16.mxu0 0
    %254 = vmatmul.mubr.bf16.gmra.mrb[0].mxu0 %v115
    %v255 = vpop.f32.mrb[0].mxu0
    %v256 = vadd.f32 0.0, %v255
    %v257 = vpop.f32.mrb[0].mxu0
    %v258 = vpop.f32.mrb[0].mxu0
    %v259 = vadd.f32 0.0, %v258
    %v260 = vpop.f32.mrb[0].mxu0
    %261 = vmatprep.mubr.bf16.mxu0 0
    %262 = vmatmul.mubr.bf16.gmra.mrb[0].mxu0 %v116
    %v263 = vpop.f32.mrb[0].mxu0
    %v264 = vadd.f32 0.0, %v263
    %v265 = vpop.f32.mrb[0].mxu0
    %v266 = vpop.f32.mrb[0].mxu0
    %v267 = vadd.f32 0.0, %v266
    %v268 = vpop.f32.mrb[0].mxu0
    %269 = vdwg.mxu0
    %v270 = vmul.f32 %v208, %v208
    %v271 = vmul.f32 %v211, %v211
    %v272 = vmul.f32 %v216, %v216
    %v273 = vmul.f32 %v219, %v219
    %v274 = vmul.f32 %v224, %v224
    %v275 = vmul.f32 %v227, %v227
    %v276 = vmul.f32 %v232, %v232
    %v277 = vmul.f32 %v235, %v235
    %v278 = vmul.f32 %v240, %v240
    %v279 = vmul.f32 %v243, %v243
    %v280 = vmul.f32 %v248, %v248
    %v281 = vmul.f32 %v251, %v251
    %v282 = vmul.f32 %v256, %v256
    %v283 = vmul.f32 %v259, %v259
    %v284 = vmul.f32 %v264, %v264
    %v285 = vmul.f32 %v267, %v267
    %286 = vadd.xlane.f32.xlu0 %v270
    %v287 = vpop.xlane.xlu0 %286
    %288 = vadd.xlane.f32.xlu0 %v271
    %v289 = vpop.xlane.xlu0 %288
    %290 = vadd.xlane.f32.xlu0 %v272
    %v291 = vpop.xlane.xlu0 %290
    %292 = vadd.xlane.f32.xlu0 %v273
    %v293 = vpop.xlane.xlu0 %292
    %294 = vadd.xlane.f32.xlu0 %v274
    %v295 = vpop.xlane.xlu0 %294
    %296 = vadd.xlane.f32.xlu0 %v275
    %v297 = vpop.xlane.xlu0 %296
    %298 = vadd.xlane.f32.xlu0 %v276
    %v299 = vpop.xlane.xlu0 %298
    %300 = vadd.xlane.f32.xlu0 %v277
    %v301 = vpop.xlane.xlu0 %300
    %302 = vadd.xlane.f32.xlu0 %v278
    %v303 = vpop.xlane.xlu0 %302
    %304 = vadd.xlane.f32.xlu0 %v279
    %v305 = vpop.xlane.xlu0 %304
    %306 = vadd.xlane.f32.xlu0 %v280
    %v307 = vpop.xlane.xlu0 %306
    %308 = vadd.xlane.f32.xlu0 %v281
    %v309 = vpop.xlane.xlu0 %308
    %310 = vadd.xlane.f32.xlu0 %v282
    %v311 = vpop.xlane.xlu0 %310
    %312 = vadd.xlane.f32.xlu0 %v283
    %v313 = vpop.xlane.xlu0 %312
    %314 = vadd.xlane.f32.xlu0 %v284
    %v315 = vpop.xlane.xlu0 %314
    %316 = vadd.xlane.f32.xlu0 %v285
    %v317 = vpop.xlane.xlu0 %316
    %v318 = vadd.f32 %v287, 1e-12
    %v319 = vadd.f32 %v289, 1e-12
    %v320 = vadd.f32 %v291, 1e-12
    %v321 = vadd.f32 %v293, 1e-12
    %v322 = vadd.f32 %v295, 1e-12
    %v323 = vadd.f32 %v297, 1e-12
    %v324 = vadd.f32 %v299, 1e-12
    %v325 = vadd.f32 %v301, 1e-12
    %v326 = vadd.f32 %v303, 1e-12
    %v327 = vadd.f32 %v305, 1e-12
    %v328 = vadd.f32 %v307, 1e-12
    %v329 = vadd.f32 %v309, 1e-12
    %v330 = vadd.f32 %v311, 1e-12
    %v331 = vadd.f32 %v313, 1e-12
    %v332 = vadd.f32 %v315, 1e-12
    %v333 = vadd.f32 %v317, 1e-12
    %v334 = vrsqrt.pop %v318
    %v335 = vrsqrt.pop %v319
    %v336 = vrsqrt.pop %v320
    %v337 = vrsqrt.pop %v321
    %v338 = vrsqrt.pop %v322
    %v339 = vrsqrt.pop %v323
    %v340 = vrsqrt.pop %v324
    %v341 = vrsqrt.pop %v325
    %v342 = vrsqrt.pop %v326
    %v343 = vrsqrt.pop %v327
    %v344 = vrsqrt.pop %v328
    %v345 = vrsqrt.pop %v329
    %v346 = vrsqrt.pop %v330
    %v347 = vrsqrt.pop %v331
    %v348 = vrsqrt.pop %v332
    %v349 = vrsqrt.pop %v333
    %s350 = sld [smem:[#allocation2]]
    %v351 = vstv %s350
    %v352 = vmul.f32 %v351, %v208
    %v353 = vmul.f32 %v351, %v211
    %v354 = vmul.f32 %v351, %v216
    %v355 = vmul.f32 %v351, %v219
    %v356 = vmul.f32 %v351, %v224
    %v357 = vmul.f32 %v351, %v227
    %v358 = vmul.f32 %v351, %v232
    %v359 = vmul.f32 %v351, %v235
    %v360 = vmul.f32 %v351, %v240
    %v361 = vmul.f32 %v351, %v243
    %v362 = vmul.f32 %v351, %v248
    %v363 = vmul.f32 %v351, %v251
    %v364 = vmul.f32 %v351, %v256
    %v365 = vmul.f32 %v351, %v259
    %v366 = vmul.f32 %v351, %v264
    %v367 = vmul.f32 %v351, %v267
    %v368 = vmul.f32 %v352, %v334
    %v369 = vmul.f32 %v353, %v335
    %v370 = vmul.f32 %v354, %v336
    %v371 = vmul.f32 %v355, %v337
    %v372 = vmul.f32 %v356, %v338
    %v373 = vmul.f32 %v357, %v339
    %v374 = vmul.f32 %v358, %v340
    %v375 = vmul.f32 %v359, %v341
    %v376 = vmul.f32 %v360, %v342
    %v377 = vmul.f32 %v361, %v343
    %v378 = vmul.f32 %v362, %v344
    %v379 = vmul.f32 %v363, %v345
    %v380 = vmul.f32 %v364, %v346
    %v381 = vmul.f32 %v365, %v347
    %v382 = vmul.f32 %v366, %v348
    %v383 = vmul.f32 %v367, %v349
    %384 = vxpose.xlu0.b32.start [1/16] %v368, 128
    %385 = vxpose.xlu0.b32.cont [2/16] %v369, 128
    %386 = vxpose.xlu0.b32.cont [3/16] %v370, 128
    %387 = vxpose.xlu0.b32.cont [4/16] %v371, 128
    %388 = vxpose.xlu0.b32.cont [5/16] %v372, 128
    %389 = vxpose.xlu0.b32.cont [6/16] %v373, 128
    %390 = vxpose.xlu0.b32.cont [7/16] %v374, 128
    %391 = vxpose.xlu0.b32.cont [8/16] %v375, 128
    %392 = vxpose.xlu0.b32.cont [9/16] %v376, 128
    %393 = vxpose.xlu0.b32.cont [10/16] %v377, 128
    %394 = vxpose.xlu0.b32.cont [11/16] %v378, 128
    %395 = vxpose.xlu0.b32.cont [12/16] %v379, 128
    %396 = vxpose.xlu0.b32.cont [13/16] %v380, 128
    %397 = vxpose.xlu0.b32.cont [14/16] %v381, 128
    %398 = vxpose.xlu0.b32.cont [15/16] %v382, 128
    %399 = vxpose.xlu0.b32.end [16/16] %v383, 128
    %v400 = vpop.trf.xlu0
    %v401 = vpop.trf.xlu0
    %v402 = vpop.trf.xlu0
    %v403 = vpop.trf.xlu0
    %v404 = vpop.trf.xlu0
    %v405 = vpop.trf.xlu0
    %v406 = vpop.trf.xlu0
    %v407 = vpop.trf.xlu0
    %v408 = vpop.trf.xlu0
    %v409 = vpop.trf.xlu0
    %v410 = vpop.trf.xlu0
    %v411 = vpop.trf.xlu0
    %v412 = vpop.trf.xlu0
    %v413 = vpop.trf.xlu0
    %v414 = vpop.trf.xlu0
    %v415 = vpop.trf.xlu0
    %v416 = vpack.c.bf16 %v401, %v400
    %v417 = vpack.c.bf16 %v403, %v402
    %v418 = vpack.c.bf16 %v405, %v404
    %v419 = vpack.c.bf16 %v407, %v406
    %v420 = vpack.c.bf16 %v409, %v408
    %v421 = vpack.c.bf16 %v411, %v410
    %v422 = vpack.c.bf16 %v413, %v412
    %v423 = vpack.c.bf16 %v415, %v414
    %v432 = vunpack.c.l.b16 %v416
    %v433 = vunpack.c.h.b16 %v416
    %v434 = vunpack.c.l.b16 %v417
    %v435 = vunpack.c.h.b16 %v417
    %v436 = vunpack.c.l.b16 %v418
    %v437 = vunpack.c.h.b16 %v418
    %v438 = vunpack.c.l.b16 %v419
    %v439 = vunpack.c.h.b16 %v419
    %v440 = vunpack.c.l.b16 %v420
    %v441 = vunpack.c.h.b16 %v420
    %v442 = vunpack.c.l.b16 %v421
    %v443 = vunpack.c.h.b16 %v421
    %v444 = vunpack.c.l.b16 %v422
    %v445 = vunpack.c.h.b16 %v422
    %v446 = vunpack.c.l.b16 %v423
    %v447 = vunpack.c.h.b16 %v423
    %v448 = vpack.c.b16 %v432, %v432
    %v449 = vpack.c.b16 %v433, %v433
    %v450 = vpack.c.b16 %v434, %v434
    %v451 = vpack.c.b16 %v435, %v435
    %v452 = vpack.c.b16 %v436, %v436
    %v453 = vpack.c.b16 %v437, %v437
    %v454 = vpack.c.b16 %v438, %v438
    %v455 = vpack.c.b16 %v439, %v439
    %v456 = vpack.c.b16 %v440, %v440
    %v457 = vpack.c.b16 %v441, %v441
    %v458 = vpack.c.b16 %v442, %v442
    %v459 = vpack.c.b16 %v443, %v443
    %v460 = vpack.c.b16 %v444, %v444
    %v461 = vpack.c.b16 %v445, %v445
    %v462 = vpack.c.b16 %v446, %v446
    %v463 = vpack.c.b16 %v447, %v447
    %480 = vst [vmem:[#allocation8] sm:$0xf] %v448
    %481 = vst [vmem:[#allocation8 + $0x4] sm:$0xf] %v449
    %482 = vst [vmem:[#allocation8 + $0x8] sm:$0xf] %v450
    %483 = vst [vmem:[#allocation8 + $0xc] sm:$0xf] %v451
    %484 = vst [vmem:[#allocation8 + $0x10] sm:$0xf] %v452
    %485 = vst [vmem:[#allocation8 + $0x14] sm:$0xf] %v453
    %486 = vst [vmem:[#allocation8 + $0x18] sm:$0xf] %v454
    %487 = vst [vmem:[#allocation8 + $0x1c] sm:$0xf] %v455
    %488 = vst [vmem:[#allocation8 + $0x20] sm:$0xf] %v456
    %489 = vst [vmem:[#allocation8 + $0x24] sm:$0xf] %v457
    %490 = vst [vmem:[#allocation8 + $0x28] sm:$0xf] %v458
    %491 = vst [vmem:[#allocation8 + $0x2c] sm:$0xf] %v459
    %492 = vst [vmem:[#allocation8 + $0x30] sm:$0xf] %v460
    %493 = vst [vmem:[#allocation8 + $0x34] sm:$0xf] %v461
    %494 = vst [vmem:[#allocation8 + $0x38] sm:$0xf] %v462
    %495 = vst [vmem:[#allocation8 + $0x3c] sm:$0xf] %v463
    // Predicated region
    $region22: #{tpu_custom_call.1} parent=1 // pred_check
      _
    $region23: #{tpu_custom_call.1} parent=1 // pred_check_branch
      %497 = sbr.rel (0) target = $region25
    $region24: #{tpu_custom_call.1} parent=1 // pred_region
      %s499 = ssub.s32 1024, 1024
      %500 = vsyncadd [#allocation5], %s499
      %s501 = sshll.u32 [#allocation8], 4
      %s502 = int_to_ptr.vmem [resolvable:$true] %s501
      %507 = dma.vmem_to_hbm [thread:$0]  %s502, 1024, %s3, [#allocation5], 64, 64, 4
    $region25: #{tpu_custom_call.1} parent=1 // pred_fallthru
      _
    // Predicated region
    $region26: #{tpu_custom_call.1} parent=1 // pred_check
      _
    $region27: #{tpu_custom_call.1} parent=1 // pred_check_branch
      %509 = sbr.rel (0) target = $region29
    $region28: #{tpu_custom_call.1} parent=1 // pred_region
      %510 = dma.done [#allocation5], 1024
    $region29: #{tpu_custom_call.1} parent=1 // pred_fallthru
      _
    %511 = vsyncpa [#allocation4], 1
    %512 = vsyncpa [#allocation7], 1
    %513 = vsyncpa [#allocation5], 1

</llo_original>
